<compile_context>
chip_gen: v6e
topology: v6e:2x2x1
jax: 0.10.0
libtpu: 0.0.40
codegen_flags: <defaults>
</compile_context>

<pallas_src>
import functools
from typing import NamedTuple

import jax
import jax.numpy as jnp
from jax.experimental import pallas as pl
from jax.experimental.pallas import tpu as pltpu

LANE = 128
SUBLANE = 8
NEG_MASK = -1e30   # finite sentinel for padded action logits (avoids inf math)


def _round_up(n, m):
    return ((n + m - 1) // m) * m


class PreparedParams(NamedTuple):
    w1p: jax.Array   # (state_dim, h_pad) bf16
    w2p: jax.Array   # (h_pad, h_pad)     bf16
    whp: jax.Array   # (h_pad, a_pad)     bf16
    bpk: jax.Array   # (8, f_pad)         f32  (rows: b1, b2, bh+mask)
    state_dim: int
    hidden: int
    action_num: int


def policy_discrete_kernel(x_ref, w1_ref, w2_ref, wh_ref, b_ref, out_ref):
    h_pad = w1_ref.shape[1]   # padded hidden width
    a_pad = wh_ref.shape[1]   # padded action width

    # --- MLP backbone: bf16 MXU operands, f32 accumulation ---
    xb = x_ref[...].astype(jnp.bfloat16)
    h1 = jnp.tanh(
        jnp.dot(xb, w1_ref[...], preferred_element_type=jnp.float32)
        + b_ref[0:1, :h_pad]
    )
    h2 = jnp.tanh(
        jnp.dot(h1.astype(jnp.bfloat16), w2_ref[...],
                preferred_element_type=jnp.float32)
        + b_ref[1:2, :h_pad]
    )

    # --- action head; bias row 2 already carries -1e30 on padded action lanes,
    # so the softmax mask rides the bias add for free (no iota / where). ---
    logits = (
        jnp.dot(h2.astype(jnp.bfloat16), wh_ref[...],
                preferred_element_type=jnp.float32)
        + b_ref[2:3, :a_pad]
    )

    # --- softmax along dim=1 (last dim), f32, exact normalization ---
    m = jnp.max(logits, axis=-1, keepdims=True)
    e = jnp.exp(logits - m)
    denom = jnp.sum(e, axis=-1, keepdims=True)
    out_ref[...] = (e / denom).astype(out_ref.dtype)


def prepare_params(params):
    """One-time pad / bf16-cast of the module parameters (hoisted out of the
    per-call forward path). Call this once after (re)initializing params."""
    w1, b1, w2, b2, wh, bh = params
    state_dim, hidden = w1.shape
    action_num = wh.shape[1]

    h_pad = _round_up(hidden, LANE)
    a_pad = _round_up(action_num, LANE)
    f_pad = max(h_pad, a_pad)

    w1p = jnp.zeros((state_dim, h_pad), jnp.bfloat16)
    w1p = w1p.at[:, :hidden].set(w1.astype(jnp.bfloat16))
    w2p = jnp.zeros((h_pad, h_pad), jnp.bfloat16)
    w2p = w2p.at[:hidden, :hidden].set(w2.astype(jnp.bfloat16))
    whp = jnp.zeros((h_pad, a_pad), jnp.bfloat16)
    whp = whp.at[:hidden, :action_num].set(wh.astype(jnp.bfloat16))

    # All three biases folded into one (8, f_pad) f32 operand. Row 2 doubles
    # as the softmax mask: padded action lanes get a large negative sentinel.
    bpk = jnp.zeros((SUBLANE, f_pad), jnp.float32)
    bpk = bpk.at[0, :hidden].set(b1.reshape(-1).astype(jnp.float32))
    bpk = bpk.at[1, :hidden].set(b2.reshape(-1).astype(jnp.float32))
    bh_row = jnp.full((a_pad,), NEG_MASK, jnp.float32)
    bh_row = bh_row.at[:action_num].set(bh.reshape(-1).astype(jnp.float32))
    bpk = bpk.at[2, :a_pad].set(bh_row)

    return PreparedParams(w1p, w2p, whp, bpk, state_dim, hidden, action_num)


def policy_discrete_forward(x, prepared: PreparedParams, *,
                            batch_tile=2048, out_dtype=jnp.float32):
    """Returns action probabilities (the `probs` of the Categorical dist)."""
    w1p, w2p, whp, bpk, state_dim, hidden, action_num = prepared
    batch = x.shape[0]
    assert x.shape[1] == state_dim
    h_pad = w1p.shape[1]
    a_pad = whp.shape[1]
    f_pad = bpk.shape[1]

    # Batch tile: multiple of 8 sublanes; for batch > 8 cap at ceil(batch/2)
    # so the grid has >= 2 steps and the "parallel" axis can shard across
    # v7x's two TensorCores. Default cap 2048 keeps intermediates (~5 x
    # tb x 128 x 4B) well under v7x's 64 MiB VMEM.
    tb = _round_up(min(batch, batch_tile), SUBLANE)
    if batch > SUBLANE:
        tb = min(tb, _round_up(pl.cdiv(batch, 2), SUBLANE))
    b_pad = _round_up(batch, tb)
    grid = (b_pad // tb,)

    # x is passed with its real (unpadded) feature width; only the batch dim
    # is padded to a tile multiple when necessary.
    x_in = x.astype(jnp.float32)
    if b_pad != batch:
        x_in = jnp.pad(x_in, ((0, b_pad - batch), (0, 0)))

    out = pl.pallas_call(
        policy_discrete_kernel,
        out_shape=jax.ShapeDtypeStruct((b_pad, a_pad), out_dtype),
        grid=grid,
        in_specs=[
            pl.BlockSpec((tb, state_dim), lambda i: (i, 0)),     # x: batch-tiled
            pl.BlockSpec((state_dim, h_pad), lambda i: (0, 0)),  # W1: resident
            pl.BlockSpec((h_pad, h_pad), lambda i: (0, 0)),      # W2: resident
            pl.BlockSpec((h_pad, a_pad), lambda i: (0, 0)),      # Wh: resident
            pl.BlockSpec((SUBLANE, f_pad), lambda i: (0, 0)),    # biases+mask
        ],
        out_specs=pl.BlockSpec((tb, a_pad), lambda i: (i, 0)),
        compiler_params=pltpu.CompilerParams(
            dimension_semantics=("parallel",),
            vmem_limit_bytes=32 * 1024 * 1024,
        ),
    )(x_in, w1p, w2p, whp, bpk)

    # Slice off batch padding and padded action lanes for the caller.
    return out[:batch, :action_num]


def init_params(key, state_dim, hidden, action_num):
    """Deterministic init mimicking PyTorch nn.Linear defaults, with the
    PolicyDiscrete-specific head init (weight * 0.1, bias * 0)."""
    def linear_init(k, fan_in, fan_out):
        kw, kb = jax.random.split(k)
        bound = 1.0 / jnp.sqrt(fan_in)
        w = jax.random.uniform(kw, (fan_in, fan_out), jnp.float32, -bound, bound)
        b = jax.random.uniform(kb, (1, fan_out), jnp.float32, -bound, bound)
        return w, b

    k1, k2, k3 = jax.random.split(key, 3)
    w1, b1 = linear_init(k1, state_dim, hidden)
    w2, b2 = linear_init(k2, hidden, hidden)
    wh, bh = linear_init(k3, hidden, action_num)
    wh = wh * 0.1          # self.action_head.weight.data.mul_(0.1)
    bh = bh * 0.0          # self.action_head.bias.data.mul_(0.0)
    return (w1, b1, w2, b2, wh, bh)


def reference_forward(x, params):
    w1, b1, w2, b2, wh, bh = params
    h = jnp.tanh(x @ w1 + b1)
    h = jnp.tanh(h @ w2 + b2)
    logits = h @ wh + bh
    return jax.nn.softmax(logits, axis=1)


if __name__ == "__main__":
    batch, state_dim, hidden, action_num = 2, 16, 32, 6

    key = jax.random.PRNGKey(0)
    kx, kp = jax.random.split(key)
    x = jax.random.normal(kx, (batch, state_dim), jnp.float32)
    params = init_params(kp, state_dim, hidden, action_num)

    # One-time parameter prep (padding / bf16 cast) outside the forward path.
    prepared = prepare_params(params)

    probs = jax.block_until_ready(policy_discrete_forward(x, prepared))
    ref = reference_forward(x, params)

    assert probs.shape == (batch, action_num)
    # Exact softmax normalization -> rows sum to 1 up to f32 rounding.
    assert jnp.allclose(jnp.sum(probs, axis=1), 1.0, atol=1e-4)
    # Loose tolerances account for bf16 MXU operands.
    assert jnp.allclose(probs, ref, atol=5e-3, rtol=1e-2)

    # TODO(synk): Categorical sampling / kl / log_prob / get_fim are host-side
    # distribution ops on the returned probs, not part of the fused kernel.
    print("KERNEL_OK")
</pallas_src>

<mosaic_0001>
module attributes {stable_mosaic.version = 11 : i64} {
  func.func @policy_discrete_kernel(%arg0: i32, %arg1: memref<8x16xf32, #tpu.memory_space<vmem>>, %arg2: memref<16x128xbf16, #tpu.memory_space<vmem>>, %arg3: memref<128x128xbf16, #tpu.memory_space<vmem>>, %arg4: memref<128x128xbf16, #tpu.memory_space<vmem>>, %arg5: memref<8x128xf32, #tpu.memory_space<vmem>>, %arg6: memref<8x128xf32, #tpu.memory_space<vmem>>) attributes {dimension_semantics = [#tpu.dimension_semantics<parallel>], iteration_bounds = array<i64: 1>, scalar_prefetch = 0 : i64, scratch_operands = 0 : i64, tpu.core_type = #tpu.core_type<tc>, window_params = [{transform_indices = @transform_0, window_bounds = array<i64: 8, 16>}, {pipeline_mode = #tpu.pipeline_mode<synchronous>, transform_indices = @transform_1, window_bounds = array<i64: 16, 128>}, {pipeline_mode = #tpu.pipeline_mode<synchronous>, transform_indices = @transform_2, window_bounds = array<i64: 128, 128>}, {pipeline_mode = #tpu.pipeline_mode<synchronous>, transform_indices = @transform_3, window_bounds = array<i64: 128, 128>}, {pipeline_mode = #tpu.pipeline_mode<synchronous>, transform_indices = @transform_4, window_bounds = array<i64: 8, 128>}, {transform_indices = @transform_5, window_bounds = array<i64: 8, 128>}]} {
    %c0 = arith.constant 0 : index
    %c0_0 = arith.constant 0 : index
    %0 = vector.load %arg1[%c0, %c0_0] : memref<8x16xf32, #tpu.memory_space<vmem>>, vector<8x16xf32>
    %1 = arith.truncf %0 : vector<8x16xf32> to vector<8x16xbf16>
    %c0_1 = arith.constant 0 : index
    %c0_2 = arith.constant 0 : index
    %2 = vector.load %arg2[%c0_1, %c0_2] : memref<16x128xbf16, #tpu.memory_space<vmem>>, vector<16x128xbf16>
    %cst = arith.constant dense<0.000000e+00> : vector<8x128xf32>
    %3 = tpu.matmul %1, %2, %cst {dimension_numbers = #tpu.dot_dimension_numbers<[1], [0], [0], [1], [0, 0, 1, 1], [], []>} : vector<8x16xbf16>, vector<16x128xbf16>, vector<8x128xf32> -> vector<8x128xf32>
    %c0_3 = arith.constant 0 : index
    %c0_4 = arith.constant 0 : index
    %4 = vector.load %arg5[%c0_3, %c0_4] : memref<8x128xf32, #tpu.memory_space<vmem>>, vector<1x128xf32>
    %5 = vector.broadcast %4 : vector<1x128xf32> to vector<8x128xf32>
    %6 = arith.addf %3, %5 : vector<8x128xf32>
    %7 = math.tanh %6 : vector<8x128xf32>
    %8 = arith.truncf %7 : vector<8x128xf32> to vector<8x128xbf16>
    %c0_5 = arith.constant 0 : index
    %c0_6 = arith.constant 0 : index
    %9 = vector.load %arg3[%c0_5, %c0_6] : memref<128x128xbf16, #tpu.memory_space<vmem>>, vector<128x128xbf16>
    %cst_7 = arith.constant dense<0.000000e+00> : vector<8x128xf32>
    %10 = tpu.matmul %8, %9, %cst_7 {dimension_numbers = #tpu.dot_dimension_numbers<[1], [0], [0], [1], [0, 0, 1, 1], [], []>} : vector<8x128xbf16>, vector<128x128xbf16>, vector<8x128xf32> -> vector<8x128xf32>
    %c1 = arith.constant 1 : index
    %c0_8 = arith.constant 0 : index
    %11 = vector.load %arg5[%c1, %c0_8] : memref<8x128xf32, #tpu.memory_space<vmem>>, vector<1x128xf32>
    %12 = vector.broadcast %11 : vector<1x128xf32> to vector<8x128xf32>
    %13 = arith.addf %10, %12 : vector<8x128xf32>
    %14 = math.tanh %13 : vector<8x128xf32>
    %15 = arith.truncf %14 : vector<8x128xf32> to vector<8x128xbf16>
    %c0_9 = arith.constant 0 : index
    %c0_10 = arith.constant 0 : index
    %16 = vector.load %arg4[%c0_9, %c0_10] : memref<128x128xbf16, #tpu.memory_space<vmem>>, vector<128x128xbf16>
    %cst_11 = arith.constant dense<0.000000e+00> : vector<8x128xf32>
    %17 = tpu.matmul %15, %16, %cst_11 {dimension_numbers = #tpu.dot_dimension_numbers<[1], [0], [0], [1], [0, 0, 1, 1], [], []>} : vector<8x128xbf16>, vector<128x128xbf16>, vector<8x128xf32> -> vector<8x128xf32>
    %c2 = arith.constant 2 : index
    %c0_12 = arith.constant 0 : index
    %18 = vector.load %arg5[%c2, %c0_12] : memref<8x128xf32, #tpu.memory_space<vmem>>, vector<1x128xf32>
    %19 = vector.broadcast %18 : vector<1x128xf32> to vector<8x128xf32>
    %20 = arith.addf %17, %19 : vector<8x128xf32>
    %cst_13 = arith.constant dense<0xFF800000> : vector<8xf32>
    %21 = vector.multi_reduction <maximumf>, %20, %cst_13 [1] : vector<8x128xf32> to vector<8xf32>
    %22 = vector.shape_cast %21 : vector<8xf32> to vector<8x1xf32>
    %23 = vector.broadcast %22 : vector<8x1xf32> to vector<8x128xf32>
    %24 = arith.subf %20, %23 : vector<8x128xf32>
    %25 = math.exp %24 : vector<8x128xf32>
    %cst_14 = arith.constant dense<0.000000e+00> : vector<8xf32>
    %26 = vector.multi_reduction <add>, %25, %cst_14 [1] : vector<8x128xf32> to vector<8xf32>
    %27 = vector.shape_cast %26 : vector<8xf32> to vector<8x1xf32>
    %28 = vector.broadcast %27 : vector<8x1xf32> to vector<8x128xf32>
    %29 = arith.divf %25, %28 : vector<8x128xf32>
    %c0_15 = arith.constant 0 : index
    %c0_16 = arith.constant 0 : index
    %30 = vector.load %arg6[%c0_15, %c0_16] : memref<8x128xf32, #tpu.memory_space<vmem>>, vector<8x128xf32>
    tpu.vector_store %arg6[%c0_15, %c0_16], %29 {strides = array<i32>} : memref<8x128xf32, #tpu.memory_space<vmem>>, vector<8x128xf32>,
    return
  }
  func.func @transform_0(%arg0: i32) -> (i32, i32) {
    %c0_i32 = arith.constant 0 : i32
    %c0_i32_0 = arith.constant 0 : i32
    return %arg0, %c0_i32 : i32, i32
  }
  func.func @transform_1(%arg0: i32) -> (i32, i32) {
    %c0_i32 = arith.constant 0 : i32
    %c0_i32_0 = arith.constant 0 : i32
    %c0_i32_1 = arith.constant 0 : i32
    return %c0_i32, %c0_i32_0 : i32, i32
  }
  func.func @transform_2(%arg0: i32) -> (i32, i32) {
    %c0_i32 = arith.constant 0 : i32
    %c0_i32_0 = arith.constant 0 : i32
    %c0_i32_1 = arith.constant 0 : i32
    return %c0_i32, %c0_i32_0 : i32, i32
  }
  func.func @transform_3(%arg0: i32) -> (i32, i32) {
    %c0_i32 = arith.constant 0 : i32
    %c0_i32_0 = arith.constant 0 : i32
    %c0_i32_1 = arith.constant 0 : i32
    return %c0_i32, %c0_i32_0 : i32, i32
  }
  func.func @transform_4(%arg0: i32) -> (i32, i32) {
    %c0_i32 = arith.constant 0 : i32
    %c0_i32_0 = arith.constant 0 : i32
    %c0_i32_1 = arith.constant 0 : i32
    return %c0_i32, %c0_i32_0 : i32, i32
  }
  func.func @transform_5(%arg0: i32) -> (i32, i32) {
    %c0_i32 = arith.constant 0 : i32
    %c0_i32_0 = arith.constant 0 : i32
    return %arg0, %c0_i32 : i32, i32
  }
}

</mosaic_0001>

<llo_original>
// kernel: tpu_custom_call.1
$region0: #{tpu_custom_call.1}
  #allocation0 [shape = 'u32[]', space=smem, size = 0x4, offset = 0x4, fixed_abs, tag = 'smem constant byte address 0x4 - core index']
  #allocation1 [shape = 'u32[144,128]{1,0:T(1,128)}', space=vmem, size = 0x12000, scoped, tag = 'internal scratch']
  %s0 = inlined_call_operand.hbm [shape: f32[8,16], index: 0, kind: input, shape index: {}]
  %s1 = inlined_call_operand.hbm [shape: bf16[16,128], index: 1, kind: input, shape index: {}]
  %s2 = inlined_call_operand.hbm [shape: bf16[128,128], index: 2, kind: input, shape index: {}]
  %s3 = inlined_call_operand.hbm [shape: bf16[128,128], index: 3, kind: input, shape index: {}]
  %s4 = inlined_call_operand.hbm [shape: f32[8,128], index: 4, kind: input, shape index: {}]
  %s5 = inlined_call_operand.hbm [shape: f32[8,128], index: 5, kind: output, shape index: {}]
  %s6 = sld [smem:[#allocation0]]
  $region50: #{tpu_custom_call.1} parent=0
    _
  %s8 = ssub.s32 1, %s6
  %s9 = scalar_select 0, %s8, %s6
  $region1: #{tpu_custom_call.1} parent=0
    #allocation2 [shape = 'u8[4096]{0}', space=vmem, size = 0x1000, scoped, tag = 'input window, operand 0, single buffered']
    #allocation3 [shape = 's32[1]{0}', space=sflag, size = 0x4, scoped, tag = 'scoped memory for tpu_custom_call.1']
    #allocation4 [shape = 's32[1]{0}', space=sflag, size = 0x4, scoped, tag = 'scoped memory for tpu_custom_call.1']
    #allocation5 [shape = 'u8[4096]{0}', space=vmem, size = 0x1000, scoped, tag = 'input window, operand 1, single buffered']
    #allocation6 [shape = 's32[1]{0}', space=sflag, size = 0x4, scoped, tag = 'scoped memory for tpu_custom_call.1']
    #allocation7 [shape = 'u8[32768]{0}', space=vmem, size = 0x8000, scoped, tag = 'input window, operand 2, single buffered']
    #allocation8 [shape = 'u8[32768]{0}', space=vmem, size = 0x8000, scoped, tag = 'input window, operand 3, single buffered']
    #allocation9 [shape = 's32[1]{0}', space=sflag, size = 0x4, scoped, tag = 'scoped memory for tpu_custom_call.1']
    #allocation10 [shape = 'u8[4096]{0}', space=vmem, size = 0x1000, scoped, tag = 'input window, operand 4, single buffered']
    #allocation11 [shape = 'u8[4096]{0}', space=vmem, size = 0x1000, scoped, tag = 'output window, operand 0, single buffered']
    %10 = vsyncpa [#allocation3], 0
    %11 = vsyncpa [#allocation6], 0
    %12 = vsyncpa [#allocation9], 0
    %13 = vsyncpa [#allocation4], 0
    // Predicated region
    $region2: #{tpu_custom_call.1} parent=1 // pred_check
      _
    $region3: #{tpu_custom_call.1} parent=1 // pred_check_branch
      %15 = sbr.rel (0) target = $region5
    $region4: #{tpu_custom_call.1} parent=1 // pred_region
      %s17 = ssub.s32 128, 128
      %18 = vsyncadd [#allocation3], %s17
      %s20 = sshll.u32 [#allocation2], 4
      %s21 = int_to_ptr.vmem [resolvable:$true] %s20
      %23 = dma.hbm_to_vmem [thread:$0]  %s0, 128, %s21, [#allocation3]
    $region5: #{tpu_custom_call.1} parent=1 // pred_fallthru
      _
    // Predicated region
    $region6: #{tpu_custom_call.1} parent=1 // pred_check
      _
    $region7: #{tpu_custom_call.1} parent=1 // pred_check_branch
      %25 = sbr.rel (0) target = $region9
    $region8: #{tpu_custom_call.1} parent=1 // pred_region
      %s27 = ssub.s32 128, 128
      %28 = vsyncadd [#allocation6], %s27
      %s29 = sshll.u32 [#allocation5], 4
      %s30 = int_to_ptr.vmem [resolvable:$true] %s29
      %35 = dma.hbm_to_vmem [thread:$0]  %s1, 128, %s30, [#allocation6], 64, 64, 4
    $region9: #{tpu_custom_call.1} parent=1 // pred_fallthru
      _
    // Predicated region
    $region10: #{tpu_custom_call.1} parent=1 // pred_check
      _
    $region11: #{tpu_custom_call.1} parent=1 // pred_check_branch
      %37 = sbr.rel (0) target = $region13
    $region12: #{tpu_custom_call.1} parent=1 // pred_region
      %s39 = ssub.s32 1024, 1024
      %40 = vsyncadd [#allocation6], %s39
      %s41 = sshll.u32 [#allocation7], 4
      %s42 = int_to_ptr.vmem [resolvable:$true] %s41
      %47 = dma.hbm_to_vmem [thread:$0]  %s2, 1024, %s42, [#allocation6], 64, 64, 4
    $region13: #{tpu_custom_call.1} parent=1 // pred_fallthru
      _
    // Predicated region
    $region14: #{tpu_custom_call.1} parent=1 // pred_check
      _
    $region15: #{tpu_custom_call.1} parent=1 // pred_check_branch
      %49 = sbr.rel (0) target = $region17
    $region16: #{tpu_custom_call.1} parent=1 // pred_region
      %s51 = ssub.s32 1024, 1024
      %52 = vsyncadd [#allocation9], %s51
      %s53 = sshll.u32 [#allocation8], 4
      %s54 = int_to_ptr.vmem [resolvable:$true] %s53
      %59 = dma.hbm_to_vmem [thread:$0]  %s3, 1024, %s54, [#allocation9], 64, 64, 4
    $region17: #{tpu_custom_call.1} parent=1 // pred_fallthru
      _
    // Predicated region
    $region18: #{tpu_custom_call.1} parent=1 // pred_check
      _
    $region19: #{tpu_custom_call.1} parent=1 // pred_check_branch
      %61 = sbr.rel (0) target = $region21
    $region20: #{tpu_custom_call.1} parent=1 // pred_region
      %s63 = ssub.s32 128, 128
      %64 = vsyncadd [#allocation9], %s63
      %s66 = sshll.u32 [#allocation10], 4
      %s67 = int_to_ptr.vmem [resolvable:$true] %s66
      %69 = dma.hbm_to_vmem [thread:$0]  %s4, 128, %s67, [#allocation9]
    $region21: #{tpu_custom_call.1} parent=1 // pred_fallthru
      _
    // Predicated region
    $region22: #{tpu_custom_call.1} parent=1 // pred_check
      _
    $region23: #{tpu_custom_call.1} parent=1 // pred_check_branch
      %71 = sbr.rel (0) target = $region25
    $region24: #{tpu_custom_call.1} parent=1 // pred_region
      %72 = dma.done [#allocation3], 128
    $region25: #{tpu_custom_call.1} parent=1 // pred_fallthru
      _
    // Predicated region
    $region26: #{tpu_custom_call.1} parent=1 // pred_check
      _
    $region27: #{tpu_custom_call.1} parent=1 // pred_check_branch
      %74 = sbr.rel (0) target = $region29
    $region28: #{tpu_custom_call.1} parent=1 // pred_region
      %75 = dma.done [#allocation6], 128
    $region29: #{tpu_custom_call.1} parent=1 // pred_fallthru
      _
    // Predicated region
    $region30: #{tpu_custom_call.1} parent=1 // pred_check
      _
    $region31: #{tpu_custom_call.1} parent=1 // pred_check_branch
      %77 = sbr.rel (0) target = $region33
    $region32: #{tpu_custom_call.1} parent=1 // pred_region
      %78 = dma.done [#allocation6], 1024
    $region33: #{tpu_custom_call.1} parent=1 // pred_fallthru
      _
    // Predicated region
    $region34: #{tpu_custom_call.1} parent=1 // pred_check
      _
    $region35: #{tpu_custom_call.1} parent=1 // pred_check_branch
      %80 = sbr.rel (0) target = $region37
    $region36: #{tpu_custom_call.1} parent=1 // pred_region
      %81 = dma.done [#allocation9], 1024
    $region37: #{tpu_custom_call.1} parent=1 // pred_fallthru
      _
    // Predicated region
    $region38: #{tpu_custom_call.1} parent=1 // pred_check
      _
    $region39: #{tpu_custom_call.1} parent=1 // pred_check_branch
      %83 = sbr.rel (0) target = $region41
    $region40: #{tpu_custom_call.1} parent=1 // pred_region
      %84 = dma.done [#allocation9], 128
    $region41: #{tpu_custom_call.1} parent=1 // pred_fallthru
      _
    %v86 = vld [vmem:[#allocation2] sm:$0xff]
    %v87 = vpack.c.bf16 %v86, %v86
    %v88 = vld [vmem:[#allocation5] sm:$0xf]
    %v89 = vld [vmem:[#allocation5 + $0x4] sm:$0xf]
    %v90 = vld [vmem:[#allocation10] sm:$0x1]
    %v91 = vlaneseq
    %v92 = vshrl.u32 %v91, 7
    %v93 = vsub.s32 0, %v92
    %v94 = vrot.slane %v90, %v93
    %v97 = vunpack.c.l.b16 %v88
    %v98 = vunpack.c.l.b16 %v89
    %v99 = vpack.c.b16 %v98, %v97
    %vm101 = vcmask 130048
    %v103 = vsel %vm101, %v87, 0
    %105 = vmatprep.subr.bf16.mxu0 0
    %106 = vmatpush1.bf16.msra.mxu0 0
    %107 = vmatprep.subr.bf16.mxu0 0
    %108 = vmatpush1.bf16.msra.mxu0 0
    %109 = vmatprep.subr.bf16.mxu0 0
    %110 = vmatpush1.bf16.msra.mxu0 0
    %111 = vmatprep.subr.bf16.mxu0 0
    %112 = vmatpush1.bf16.msra.mxu0 0
    %113 = vmatprep.subr.bf16.mxu0 0
    %114 = vmatpush1.bf16.msra.mxu0 0
    %115 = vmatprep.subr.bf16.mxu0 0
    %116 = vmatpush1.bf16.msra.mxu0 0
    %117 = vmatprep.subr.bf16.mxu0 0
    %118 = vmatpush1.bf16.msra.mxu0 0
    %119 = vmatprep.subr.bf16.mxu0 0
    %120 = vmatpush1.bf16.msra.mxu0 %v99
    %121 = vmatprep.subr.bf16.mxu0 0
    %122 = vmatpush2.bf16.msra.mxu0 0
    %123 = vmatprep.subr.bf16.mxu0 0
    %124 = vmatpush2.bf16.msra.mxu0 0
    %125 = vmatprep.subr.bf16.mxu0 0
    %126 = vmatpush2.bf16.msra.mxu0 0
    %127 = vmatprep.subr.bf16.mxu0 0
    %128 = vmatpush2.bf16.msra.mxu0 0
    %129 = vmatprep.subr.bf16.mxu0 0
    %130 = vmatpush2.bf16.msra.mxu0 0
    %131 = vmatprep.subr.bf16.mxu0 0
    %132 = vmatpush2.bf16.msra.mxu0 0
    %133 = vmatprep.subr.bf16.mxu0 0
    %134 = vmatpush2.bf16.msra.mxu0 0
    %135 = vmatprep.subr.bf16.mxu0 0
    %136 = vmatpush2.bf16.msra.mxu0 0
    %137 = vmatprep.mubr.bf16.mxu0 0
    %138 = vmatmul.mubr.bf16.gmra.mxu0 %v103
    %v139 = vpop.f32.mrf.mxu0
    %v140 = vadd.f32 %v94, %v139
    %v141 = vpop.f32.mrf.mxu0
    %v142 = vpop.f32.mrf.mxu0
    %v143 = vpop.f32.mrf.mxu0
    %144 = vdwg.mxu0
    %v145 = vtanh.pop %v140
    %v146 = vpack.c.bf16 %v145, %v145
    %v147 = vld [vmem:[#allocation7] sm:$0xf]
    %v148 = vld [vmem:[#allocation7 + $0x4] sm:$0xf]
    %v149 = vld [vmem:[#allocation7 + $0x8] sm:$0xf]
    %v150 = vld [vmem:[#allocation7 + $0xc] sm:$0xf]
    %v151 = vld [vmem:[#allocation7 + $0x10] sm:$0xf]
    %v152 = vld [vmem:[#allocation7 + $0x14] sm:$0xf]
    %v153 = vld [vmem:[#allocation7 + $0x18] sm:$0xf]
    %v154 = vld [vmem:[#allocation7 + $0x1c] sm:$0xf]
    %v155 = vld [vmem:[#allocation7 + $0x20] sm:$0xf]
    %v156 = vld [vmem:[#allocation7 + $0x24] sm:$0xf]
    %v157 = vld [vmem:[#allocation7 + $0x28] sm:$0xf]
    %v158 = vld [vmem:[#allocation7 + $0x2c] sm:$0xf]
    %v159 = vld [vmem:[#allocation7 + $0x30] sm:$0xf]
    %v160 = vld [vmem:[#allocation7 + $0x34] sm:$0xf]
    %v161 = vld [vmem:[#allocation7 + $0x38] sm:$0xf]
    %v162 = vld [vmem:[#allocation7 + $0x3c] sm:$0xf]
    %v163 = vld [vmem:[#allocation10 + $0x1] sm:$0x1]
    %v164 = vlaneseq
    %v165 = vshrl.u32 %v164, 7
    %v166 = vsub.s32 0, %v165
    %v167 = vrot.slane %v163, %v166
    %v184 = vunpack.c.l.b16 %v147
    %v185 = vunpack.c.l.b16 %v148
    %v186 = vunpack.c.l.b16 %v149
    %v187 = vunpack.c.l.b16 %v150
    %v188 = vunpack.c.l.b16 %v151
    %v189 = vunpack.c.l.b16 %v152
    %v190 = vunpack.c.l.b16 %v153
    %v191 = vunpack.c.l.b16 %v154
    %v192 = vunpack.c.l.b16 %v155
    %v193 = vunpack.c.l.b16 %v156
    %v194 = vunpack.c.l.b16 %v157
    %v195 = vunpack.c.l.b16 %v158
    %v196 = vunpack.c.l.b16 %v159
    %v197 = vunpack.c.l.b16 %v160
    %v198 = vunpack.c.l.b16 %v161
    %v199 = vunpack.c.l.b16 %v162
    %v200 = vpack.c.b16 %v185, %v184
    %v201 = vpack.c.b16 %v187, %v186
    %v202 = vpack.c.b16 %v189, %v188
    %v203 = vpack.c.b16 %v191, %v190
    %v204 = vpack.c.b16 %v193, %v192
    %v205 = vpack.c.b16 %v195, %v194
    %v206 = vpack.c.b16 %v197, %v196
    %v207 = vpack.c.b16 %v199, %v198
    %216 = vmatprep.subr.bf16.mxu0 0
    %217 = vmatpush1.bf16.msra.mxu0 %v207
    %218 = vmatprep.subr.bf16.mxu0 0
    %219 = vmatpush1.bf16.msra.mxu0 %v206
    %220 = vmatprep.subr.bf16.mxu0 0
    %221 = vmatpush1.bf16.msra.mxu0 %v205
    %222 = vmatprep.subr.bf16.mxu0 0
    %223 = vmatpush1.bf16.msra.mxu0 %v204
    %224 = vmatprep.subr.bf16.mxu0 0
    %225 = vmatpush1.bf16.msra.mxu0 %v203
    %226 = vmatprep.subr.bf16.mxu0 0
    %227 = vmatpush1.bf16.msra.mxu0 %v202
    %228 = vmatprep.subr.bf16.mxu0 0
    %229 = vmatpush1.bf16.msra.mxu0 %v201
    %230 = vmatprep.subr.bf16.mxu0 0
    %231 = vmatpush1.bf16.msra.mxu0 %v200
    %232 = vmatprep.subr.bf16.mxu0 0
    %233 = vmatpush2.bf16.msra.mxu0 0
    %234 = vmatprep.subr.bf16.mxu0 0
    %235 = vmatpush2.bf16.msra.mxu0 0
    %236 = vmatprep.subr.bf16.mxu0 0
    %237 = vmatpush2.bf16.msra.mxu0 0
    %238 = vmatprep.subr.bf16.mxu0 0
    %239 = vmatpush2.bf16.msra.mxu0 0
    %240 = vmatprep.subr.bf16.mxu0 0
    %241 = vmatpush2.bf16.msra.mxu0 0
    %242 = vmatprep.subr.bf16.mxu0 0
    %243 = vmatpush2.bf16.msra.mxu0 0
    %244 = vmatprep.subr.bf16.mxu0 0
    %245 = vmatpush2.bf16.msra.mxu0 0
    %246 = vmatprep.subr.bf16.mxu0 0
    %247 = vmatpush2.bf16.msra.mxu0 0
    %248 = vmatprep.mubr.bf16.mxu0 0
    %249 = vmatmul.mubr.bf16.gmra.mxu0 %v146
    %v250 = vpop.f32.mrf.mxu0
    %v251 = vadd.f32 %v167, %v250
    %v252 = vpop.f32.mrf.mxu0
    %v253 = vpop.f32.mrf.mxu0
    %v254 = vpop.f32.mrf.mxu0
    %255 = vdwg.mxu0
    %v256 = vtanh.pop %v251
    %v257 = vpack.c.bf16 %v256, %v256
    %v258 = vld [vmem:[#allocation8] sm:$0xf]
    %v259 = vld [vmem:[#allocation8 + $0x4] sm:$0xf]
    %v260 = vld [vmem:[#allocation8 + $0x8] sm:$0xf]
    %v261 = vld [vmem:[#allocation8 + $0xc] sm:$0xf]
    %v262 = vld [vmem:[#allocation8 + $0x10] sm:$0xf]
    %v263 = vld [vmem:[#allocation8 + $0x14] sm:$0xf]
    %v264 = vld [vmem:[#allocation8 + $0x18] sm:$0xf]
    %v265 = vld [vmem:[#allocation8 + $0x1c] sm:$0xf]
    %v266 = vld [vmem:[#allocation8 + $0x20] sm:$0xf]
    %v267 = vld [vmem:[#allocation8 + $0x24] sm:$0xf]
    %v268 = vld [vmem:[#allocation8 + $0x28] sm:$0xf]
    %v269 = vld [vmem:[#allocation8 + $0x2c] sm:$0xf]
    %v270 = vld [vmem:[#allocation8 + $0x30] sm:$0xf]
    %v271 = vld [vmem:[#allocation8 + $0x34] sm:$0xf]
    %v272 = vld [vmem:[#allocation8 + $0x38] sm:$0xf]
    %v273 = vld [vmem:[#allocation8 + $0x3c] sm:$0xf]
    %v274 = vld [vmem:[#allocation10 + $0x2] sm:$0x1]
    %v275 = vlaneseq
    %v276 = vshrl.u32 %v275, 7
    %v277 = vsub.s32 0, %v276
    %v278 = vrot.slane %v274, %v277
    %v295 = vunpack.c.l.b16 %v258
    %v296 = vunpack.c.l.b16 %v259
    %v297 = vunpack.c.l.b16 %v260
    %v298 = vunpack.c.l.b16 %v261
    %v299 = vunpack.c.l.b16 %v262
    %v300 = vunpack.c.l.b16 %v263
    %v301 = vunpack.c.l.b16 %v264
    %v302 = vunpack.c.l.b16 %v265
    %v303 = vunpack.c.l.b16 %v266
    %v304 = vunpack.c.l.b16 %v267
    %v305 = vunpack.c.l.b16 %v268
    %v306 = vunpack.c.l.b16 %v269
    %v307 = vunpack.c.l.b16 %v270
    %v308 = vunpack.c.l.b16 %v271
    %v309 = vunpack.c.l.b16 %v272
    %v310 = vunpack.c.l.b16 %v273
    %v311 = vpack.c.b16 %v296, %v295
    %v312 = vpack.c.b16 %v298, %v297
    %v313 = vpack.c.b16 %v300, %v299
    %v314 = vpack.c.b16 %v302, %v301
    %v315 = vpack.c.b16 %v304, %v303
    %v316 = vpack.c.b16 %v306, %v305
    %v317 = vpack.c.b16 %v308, %v307
    %v318 = vpack.c.b16 %v310, %v309
    %327 = vmatprep.subr.bf16.mxu0 0
    %328 = vmatpush1.bf16.msra.mxu0 %v318
    %329 = vmatprep.subr.bf16.mxu0 0
    %330 = vmatpush1.bf16.msra.mxu0 %v317
    %331 = vmatprep.subr.bf16.mxu0 0
    %332 = vmatpush1.bf16.msra.mxu0 %v316
    %333 = vmatprep.subr.bf16.mxu0 0
    %334 = vmatpush1.bf16.msra.mxu0 %v315
    %335 = vmatprep.subr.bf16.mxu0 0
    %336 = vmatpush1.bf16.msra.mxu0 %v314
    %337 = vmatprep.subr.bf16.mxu0 0
    %338 = vmatpush1.bf16.msra.mxu0 %v313
    %339 = vmatprep.subr.bf16.mxu0 0
    %340 = vmatpush1.bf16.msra.mxu0 %v312
    %341 = vmatprep.subr.bf16.mxu0 0
    %342 = vmatpush1.bf16.msra.mxu0 %v311
    %343 = vmatprep.subr.bf16.mxu0 0
    %344 = vmatpush2.bf16.msra.mxu0 0
    %345 = vmatprep.subr.bf16.mxu0 0
    %346 = vmatpush2.bf16.msra.mxu0 0
    %347 = vmatprep.subr.bf16.mxu0 0
    %348 = vmatpush2.bf16.msra.mxu0 0
    %349 = vmatprep.subr.bf16.mxu0 0
    %350 = vmatpush2.bf16.msra.mxu0 0
    %351 = vmatprep.subr.bf16.mxu0 0
    %352 = vmatpush2.bf16.msra.mxu0 0
    %353 = vmatprep.subr.bf16.mxu0 0
    %354 = vmatpush2.bf16.msra.mxu0 0
    %355 = vmatprep.subr.bf16.mxu0 0
    %356 = vmatpush2.bf16.msra.mxu0 0
    %357 = vmatprep.subr.bf16.mxu0 0
    %358 = vmatpush2.bf16.msra.mxu0 0
    %359 = vmatprep.mubr.bf16.mxu0 0
    %360 = vmatmul.mubr.bf16.gmra.mxu0 %v257
    %v361 = vpop.f32.mrf.mxu0
    %v362 = vadd.f32 %v278, %v361
    %v363 = vpop.f32.mrf.mxu0
    %v364 = vpop.f32.mrf.mxu0
    %v365 = vpop.f32.mrf.mxu0
    %366 = vdwg.mxu0
    %367 = vmax.xlane.f32.xlu0 %v362
    %v368 = vpop.xlane.xlu0 %367
    %v369 = vsub.f32 %v362, %v368
    %v370 = vmul.f32 %v369, 1.442695
    %v371 = vpow.pop %v370
    %372 = vadd.xlane.f32.xlu0 %v371
    %v373 = vpop.xlane.xlu0 %372
    %v374 = vrcp.pop %v373
    %v375 = vmul.f32 %v371, %v374
    %376 = vst [vmem:[#allocation11] sm:$0xff] %v375
    // Predicated region
    $region42: #{tpu_custom_call.1} parent=1 // pred_check
      _
    $region43: #{tpu_custom_call.1} parent=1 // pred_check_branch
      %378 = sbr.rel (0) target = $region45
    $region44: #{tpu_custom_call.1} parent=1 // pred_region
      %s380 = ssub.s32 128, 128
      %381 = vsyncadd [#allocation4], %s380
      %s383 = sshll.u32 [#allocation11], 4
      %s384 = int_to_ptr.vmem [resolvable:$true] %s383
      %386 = dma.vmem_to_hbm [thread:$0]  %s384, 128, %s5, [#allocation4]
    $region45: #{tpu_custom_call.1} parent=1 // pred_fallthru
      _
    // Predicated region
    $region46: #{tpu_custom_call.1} parent=1 // pred_check
      _
    $region47: #{tpu_custom_call.1} parent=1 // pred_check_branch
      %388 = sbr.rel (0) target = $region49
    $region48: #{tpu_custom_call.1} parent=1 // pred_region
      %389 = dma.done [#allocation4], 128
    $region49: #{tpu_custom_call.1} parent=1 // pred_fallthru
      _
    %390 = vsyncpa [#allocation3], 1
    %391 = vsyncpa [#allocation6], 1
    %392 = vsyncpa [#allocation9], 1
    %393 = vsyncpa [#allocation4], 1

</llo_original>
